<compile_context>
chip_gen: v7x
topology: tpu7x:2x2x1
jax: 0.10.0
libtpu: 0.0.40
codegen_flags: <defaults>
</compile_context>

<pallas_src>
import functools

import jax
import jax.numpy as jnp
from jax.experimental import pallas as pl
from jax.experimental.pallas import tpu as pltpu


def _reverb_fir_kernel(imp_ref, xp_ref, xc_ref, o_ref, *, taps):
    """Causal FIR over the time (lane) axis of one (B, TT) tile.

    imp_ref: (taps,) f32 in SMEM   -- impulse taps (imp[0] == 1, zero tail implied)
    xp_ref : (B, TT) f32 in VMEM   -- previous time tile (halo source)
    xc_ref : (B, TT) f32 in VMEM   -- current time tile
    o_ref  : (B, TT) f32 in VMEM   -- output tile (lane-dense)
    """
    ti = pl.program_id(0)
    xc = xc_ref[...]
    # First tile has no valid previous tile (x[k < 0] == 0): zero the halo source.
    xp = xp_ref[...] * (ti > 0).astype(jnp.float32)

    lane = jax.lax.broadcasted_iota(jnp.int32, xc.shape, dimension=1)

    acc = imp_ref[0] * xc                        # tap 0 (impulse[0] == 1)
    for j in range(1, taps):                     # taps is small & static -> unrolled
        # shifted[:, i] = x[:, i - j]; the first j lanes come from the previous tile.
        rc = pltpu.roll(xc, shift=j, axis=1)     # rc[:, i] = xc[:, (i - j) mod TT]
        rp = pltpu.roll(xp, shift=j, axis=1)     # rp[:, i] = xp[:, (i - j) mod TT]
        shifted = jnp.where(lane < j, rp, rc)
        acc = acc + imp_ref[j] * shifted         # scalar (SMEM) x vector FMA on the VPU
    o_ref[...] = acc.astype(o_ref.dtype)


def _build_impulse(noise, t, decay, wet):
    """impulse[j] = sigmoid(wet) * noise[j] * exp(-softplus(-decay) * t[j] * 500); impulse[0]=1."""
    env = jnp.exp(-jax.nn.softplus(-decay) * t.astype(jnp.float32) * 500.0)
    imp = noise.astype(jnp.float32) * env * jax.nn.sigmoid(wet)
    return imp.at[0].set(1.0)                    # (length,)


def _pick_time_tile(T, length):
    for cand in (512, 256, 128):                 # lane-dense, VMEM-safe on all chips
        if T % cand == 0 and cand >= length:
            return cand
    return T                                     # single full-width block (small T)


def reverb_forward(x, noise, t, decay, wet):
    """x: (B, T, 1) float32 -> (B, T, 1) float32."""
    B, T, _ = x.shape
    length = noise.shape[0]
    assert T >= length

    imp = _build_impulse(noise, t, decay, wet)   # (length,) -- 16 floats, plain JAX glue

    TT = _pick_time_tile(T, length)
    assert length - 1 <= TT, "halo must fit in a single previous tile"
    num_tiles = T // TT

    x2d = x[..., 0].astype(jnp.float32)          # (B, T): time on the 128-lane axis

    kernel = functools.partial(_reverb_fir_kernel, taps=length)
    y2d = pl.pallas_call(
        kernel,
        out_shape=jax.ShapeDtypeStruct((B, T), jnp.float32),
        grid=(num_tiles,),
        in_specs=[
            pl.BlockSpec(memory_space=pltpu.MemorySpace.SMEM),               # impulse taps
            pl.BlockSpec((B, TT), lambda ti: (0, jnp.maximum(ti - 1, 0))),   # previous tile
            pl.BlockSpec((B, TT), lambda ti: (0, ti)),                       # current tile
        ],
        out_specs=pl.BlockSpec((B, TT), lambda ti: (0, ti)),
        compiler_params=pltpu.CompilerParams(dimension_semantics=("parallel",)),
    )(imp, x2d, x2d)
    return y2d[..., None]                        # (B, T, 1)


def reverb_forward_ref(x, noise, t, decay, wet):
    """Pure-JAX reference mirroring the PyTorch FFT implementation exactly."""
    B, T, _ = x.shape
    length = noise.shape[0]
    env = jnp.exp(-jax.nn.softplus(-decay) * t.reshape(1, length, 1) * 500.0)
    impulse = noise.reshape(1, length, 1) * env * jax.nn.sigmoid(wet)
    impulse = impulse.at[:, 0].set(1.0)
    impulse = jnp.pad(impulse, ((0, 0), (0, T - length), (0, 0)))
    sig = x[..., 0]                              # (B, T)
    ker = impulse[..., 0]                        # (1, T)
    sig = jnp.pad(sig, ((0, 0), (0, T)))
    ker = jnp.pad(ker, ((0, 0), (T, 0)))
    out = jnp.fft.irfft(jnp.fft.rfft(sig) * jnp.fft.rfft(ker), n=2 * T)
    out = out[..., out.shape[-1] // 2:]
    return out[..., None]


if __name__ == "__main__":
    key = jax.random.PRNGKey(0)
    k_noise, k_x = jax.random.split(key)

    # Module hyperparameters (small, consistent with Reverb(length, sampling_rate)).
    length = 16
    sampling_rate = 16000
    B, T = 2, 128            # signal length T >= impulse length

    # Deterministic parameter init (shapes from Reverb.__init__):
    #   noise: (length,) uniform in [-1, 1); decay = 5.0; wet = 0.0; t buffer (length,).
    noise = jax.random.uniform(k_noise, (length,), jnp.float32, -1.0, 1.0)
    decay = jnp.float32(5.0)
    wet = jnp.float32(0.0)
    t = jnp.arange(length, dtype=jnp.float32) / sampling_rate

    x = jax.random.normal(k_x, (B, T, 1), jnp.float32)

    y = reverb_forward(x, noise, t, decay, wet)
    y = jax.block_until_ready(y)

    y_ref = reverb_forward_ref(x, noise, t, decay, wet)
    assert y.shape == (B, T, 1)
    assert jnp.allclose(y, y_ref, rtol=1e-3, atol=1e-3), float(jnp.max(jnp.abs(y - y_ref)))

    print("KERNEL_OK")
</pallas_src>

<mosaic_0001>
module attributes {stable_mosaic.version = 11 : i64} {
  func.func @_reverb_fir_kernel(%arg0: i32, %arg1: memref<16xf32, #tpu.memory_space<smem>>, %arg2: memref<2x128xf32, #tpu.memory_space<vmem>>, %arg3: memref<2x128xf32, #tpu.memory_space<vmem>>, %arg4: memref<2x128xf32, #tpu.memory_space<vmem>>) attributes {dimension_semantics = [#tpu.dimension_semantics<parallel>], iteration_bounds = array<i64: 1>, scalar_prefetch = 0 : i64, scratch_operands = 0 : i64, tpu.core_type = #tpu.core_type<tc>, window_params = [{transform_indices = @transform_0, window_bounds = array<i64: 16>}, {transform_indices = @transform_1, window_bounds = array<i64: 2, 128>}, {transform_indices = @transform_2, window_bounds = array<i64: 2, 128>}, {transform_indices = @transform_3, window_bounds = array<i64: 2, 128>}]} {
    %c0 = arith.constant 0 : index
    %c0_0 = arith.constant 0 : index
    %0 = vector.load %arg3[%c0, %c0_0] : memref<2x128xf32, #tpu.memory_space<vmem>>, vector<2x128xf32>
    %c0_1 = arith.constant 0 : index
    %c0_2 = arith.constant 0 : index
    %1 = vector.load %arg2[%c0_1, %c0_2] : memref<2x128xf32, #tpu.memory_space<vmem>>, vector<2x128xf32>
    %c0_i32 = arith.constant 0 : i32
    %2 = arith.cmpi sgt, %arg0, %c0_i32 : i32
    %3 = arith.extui %2 : i1 to i32
    %4 = arith.sitofp %3 : i32 to f32
    %5 = vector.broadcast %4 : f32 to vector<2x128xf32>
    %6 = arith.mulf %1, %5 : vector<2x128xf32>
    %7 = tpu.iota {dimensions = array<i32: 1>} : vector<2x128xi32>
    %c0_3 = arith.constant 0 : index
    %8 = memref.load %arg1[%c0_3] : memref<16xf32, #tpu.memory_space<smem>>
    %9 = vector.broadcast %8 : f32 to vector<2x128xf32>
    %10 = arith.mulf %9, %0 : vector<2x128xf32>
    %c1_i32 = arith.constant 1 : i32
    %11 = tpu.dynamic_rotate %0 by %c1_i32 dim 1 : vector<2x128xf32>, i32 -> vector<2x128xf32>
    %c1_i32_4 = arith.constant 1 : i32
    %12 = tpu.dynamic_rotate %6 by %c1_i32_4 dim 1 : vector<2x128xf32>, i32 -> vector<2x128xf32>
    %c1_i32_5 = arith.constant 1 : i32
    %13 = vector.broadcast %c1_i32_5 : i32 to vector<2x128xi32>
    %14 = arith.cmpi slt, %7, %13 : vector<2x128xi32>
    %15 = arith.select %14, %12, %11 : vector<2x128xi1>, vector<2x128xf32>
    %c1 = arith.constant 1 : index
    %16 = memref.load %arg1[%c1] : memref<16xf32, #tpu.memory_space<smem>>
    %17 = vector.broadcast %16 : f32 to vector<2x128xf32>
    %18 = arith.mulf %17, %15 : vector<2x128xf32>
    %19 = arith.addf %10, %18 : vector<2x128xf32>
    %c2_i32 = arith.constant 2 : i32
    %20 = tpu.dynamic_rotate %0 by %c2_i32 dim 1 : vector<2x128xf32>, i32 -> vector<2x128xf32>
    %c2_i32_6 = arith.constant 2 : i32
    %21 = tpu.dynamic_rotate %6 by %c2_i32_6 dim 1 : vector<2x128xf32>, i32 -> vector<2x128xf32>
    %c2_i32_7 = arith.constant 2 : i32
    %22 = vector.broadcast %c2_i32_7 : i32 to vector<2x128xi32>
    %23 = arith.cmpi slt, %7, %22 : vector<2x128xi32>
    %24 = arith.select %23, %21, %20 : vector<2x128xi1>, vector<2x128xf32>
    %c2 = arith.constant 2 : index
    %25 = memref.load %arg1[%c2] : memref<16xf32, #tpu.memory_space<smem>>
    %26 = vector.broadcast %25 : f32 to vector<2x128xf32>
    %27 = arith.mulf %26, %24 : vector<2x128xf32>
    %28 = arith.addf %19, %27 : vector<2x128xf32>
    %c3_i32 = arith.constant 3 : i32
    %29 = tpu.dynamic_rotate %0 by %c3_i32 dim 1 : vector<2x128xf32>, i32 -> vector<2x128xf32>
    %c3_i32_8 = arith.constant 3 : i32
    %30 = tpu.dynamic_rotate %6 by %c3_i32_8 dim 1 : vector<2x128xf32>, i32 -> vector<2x128xf32>
    %c3_i32_9 = arith.constant 3 : i32
    %31 = vector.broadcast %c3_i32_9 : i32 to vector<2x128xi32>
    %32 = arith.cmpi slt, %7, %31 : vector<2x128xi32>
    %33 = arith.select %32, %30, %29 : vector<2x128xi1>, vector<2x128xf32>
    %c3 = arith.constant 3 : index
    %34 = memref.load %arg1[%c3] : memref<16xf32, #tpu.memory_space<smem>>
    %35 = vector.broadcast %34 : f32 to vector<2x128xf32>
    %36 = arith.mulf %35, %33 : vector<2x128xf32>
    %37 = arith.addf %28, %36 : vector<2x128xf32>
    %c4_i32 = arith.constant 4 : i32
    %38 = tpu.dynamic_rotate %0 by %c4_i32 dim 1 : vector<2x128xf32>, i32 -> vector<2x128xf32>
    %c4_i32_10 = arith.constant 4 : i32
    %39 = tpu.dynamic_rotate %6 by %c4_i32_10 dim 1 : vector<2x128xf32>, i32 -> vector<2x128xf32>
    %c4_i32_11 = arith.constant 4 : i32
    %40 = vector.broadcast %c4_i32_11 : i32 to vector<2x128xi32>
    %41 = arith.cmpi slt, %7, %40 : vector<2x128xi32>
    %42 = arith.select %41, %39, %38 : vector<2x128xi1>, vector<2x128xf32>
    %c4 = arith.constant 4 : index
    %43 = memref.load %arg1[%c4] : memref<16xf32, #tpu.memory_space<smem>>
    %44 = vector.broadcast %43 : f32 to vector<2x128xf32>
    %45 = arith.mulf %44, %42 : vector<2x128xf32>
    %46 = arith.addf %37, %45 : vector<2x128xf32>
    %c5_i32 = arith.constant 5 : i32
    %47 = tpu.dynamic_rotate %0 by %c5_i32 dim 1 : vector<2x128xf32>, i32 -> vector<2x128xf32>
    %c5_i32_12 = arith.constant 5 : i32
    %48 = tpu.dynamic_rotate %6 by %c5_i32_12 dim 1 : vector<2x128xf32>, i32 -> vector<2x128xf32>
    %c5_i32_13 = arith.constant 5 : i32
    %49 = vector.broadcast %c5_i32_13 : i32 to vector<2x128xi32>
    %50 = arith.cmpi slt, %7, %49 : vector<2x128xi32>
    %51 = arith.select %50, %48, %47 : vector<2x128xi1>, vector<2x128xf32>
    %c5 = arith.constant 5 : index
    %52 = memref.load %arg1[%c5] : memref<16xf32, #tpu.memory_space<smem>>
    %53 = vector.broadcast %52 : f32 to vector<2x128xf32>
    %54 = arith.mulf %53, %51 : vector<2x128xf32>
    %55 = arith.addf %46, %54 : vector<2x128xf32>
    %c6_i32 = arith.constant 6 : i32
    %56 = tpu.dynamic_rotate %0 by %c6_i32 dim 1 : vector<2x128xf32>, i32 -> vector<2x128xf32>
    %c6_i32_14 = arith.constant 6 : i32
    %57 = tpu.dynamic_rotate %6 by %c6_i32_14 dim 1 : vector<2x128xf32>, i32 -> vector<2x128xf32>
    %c6_i32_15 = arith.constant 6 : i32
    %58 = vector.broadcast %c6_i32_15 : i32 to vector<2x128xi32>
    %59 = arith.cmpi slt, %7, %58 : vector<2x128xi32>
    %60 = arith.select %59, %57, %56 : vector<2x128xi1>, vector<2x128xf32>
    %c6 = arith.constant 6 : index
    %61 = memref.load %arg1[%c6] : memref<16xf32, #tpu.memory_space<smem>>
    %62 = vector.broadcast %61 : f32 to vector<2x128xf32>
    %63 = arith.mulf %62, %60 : vector<2x128xf32>
    %64 = arith.addf %55, %63 : vector<2x128xf32>
    %c7_i32 = arith.constant 7 : i32
    %65 = tpu.dynamic_rotate %0 by %c7_i32 dim 1 : vector<2x128xf32>, i32 -> vector<2x128xf32>
    %c7_i32_16 = arith.constant 7 : i32
    %66 = tpu.dynamic_rotate %6 by %c7_i32_16 dim 1 : vector<2x128xf32>, i32 -> vector<2x128xf32>
    %c7_i32_17 = arith.constant 7 : i32
    %67 = vector.broadcast %c7_i32_17 : i32 to vector<2x128xi32>
    %68 = arith.cmpi slt, %7, %67 : vector<2x128xi32>
    %69 = arith.select %68, %66, %65 : vector<2x128xi1>, vector<2x128xf32>
    %c7 = arith.constant 7 : index
    %70 = memref.load %arg1[%c7] : memref<16xf32, #tpu.memory_space<smem>>
    %71 = vector.broadcast %70 : f32 to vector<2x128xf32>
    %72 = arith.mulf %71, %69 : vector<2x128xf32>
    %73 = arith.addf %64, %72 : vector<2x128xf32>
    %c8_i32 = arith.constant 8 : i32
    %74 = tpu.dynamic_rotate %0 by %c8_i32 dim 1 : vector<2x128xf32>, i32 -> vector<2x128xf32>
    %c8_i32_18 = arith.constant 8 : i32
    %75 = tpu.dynamic_rotate %6 by %c8_i32_18 dim 1 : vector<2x128xf32>, i32 -> vector<2x128xf32>
    %c8_i32_19 = arith.constant 8 : i32
    %76 = vector.broadcast %c8_i32_19 : i32 to vector<2x128xi32>
    %77 = arith.cmpi slt, %7, %76 : vector<2x128xi32>
    %78 = arith.select %77, %75, %74 : vector<2x128xi1>, vector<2x128xf32>
    %c8 = arith.constant 8 : index
    %79 = memref.load %arg1[%c8] : memref<16xf32, #tpu.memory_space<smem>>
    %80 = vector.broadcast %79 : f32 to vector<2x128xf32>
    %81 = arith.mulf %80, %78 : vector<2x128xf32>
    %82 = arith.addf %73, %81 : vector<2x128xf32>
    %c9_i32 = arith.constant 9 : i32
    %83 = tpu.dynamic_rotate %0 by %c9_i32 dim 1 : vector<2x128xf32>, i32 -> vector<2x128xf32>
    %c9_i32_20 = arith.constant 9 : i32
    %84 = tpu.dynamic_rotate %6 by %c9_i32_20 dim 1 : vector<2x128xf32>, i32 -> vector<2x128xf32>
    %c9_i32_21 = arith.constant 9 : i32
    %85 = vector.broadcast %c9_i32_21 : i32 to vector<2x128xi32>
    %86 = arith.cmpi slt, %7, %85 : vector<2x128xi32>
    %87 = arith.select %86, %84, %83 : vector<2x128xi1>, vector<2x128xf32>
    %c9 = arith.constant 9 : index
    %88 = memref.load %arg1[%c9] : memref<16xf32, #tpu.memory_space<smem>>
    %89 = vector.broadcast %88 : f32 to vector<2x128xf32>
    %90 = arith.mulf %89, %87 : vector<2x128xf32>
    %91 = arith.addf %82, %90 : vector<2x128xf32>
    %c10_i32 = arith.constant 10 : i32
    %92 = tpu.dynamic_rotate %0 by %c10_i32 dim 1 : vector<2x128xf32>, i32 -> vector<2x128xf32>
    %c10_i32_22 = arith.constant 10 : i32
    %93 = tpu.dynamic_rotate %6 by %c10_i32_22 dim 1 : vector<2x128xf32>, i32 -> vector<2x128xf32>
    %c10_i32_23 = arith.constant 10 : i32
    %94 = vector.broadcast %c10_i32_23 : i32 to vector<2x128xi32>
    %95 = arith.cmpi slt, %7, %94 : vector<2x128xi32>
    %96 = arith.select %95, %93, %92 : vector<2x128xi1>, vector<2x128xf32>
    %c10 = arith.constant 10 : index
    %97 = memref.load %arg1[%c10] : memref<16xf32, #tpu.memory_space<smem>>
    %98 = vector.broadcast %97 : f32 to vector<2x128xf32>
    %99 = arith.mulf %98, %96 : vector<2x128xf32>
    %100 = arith.addf %91, %99 : vector<2x128xf32>
    %c11_i32 = arith.constant 11 : i32
    %101 = tpu.dynamic_rotate %0 by %c11_i32 dim 1 : vector<2x128xf32>, i32 -> vector<2x128xf32>
    %c11_i32_24 = arith.constant 11 : i32
    %102 = tpu.dynamic_rotate %6 by %c11_i32_24 dim 1 : vector<2x128xf32>, i32 -> vector<2x128xf32>
    %c11_i32_25 = arith.constant 11 : i32
    %103 = vector.broadcast %c11_i32_25 : i32 to vector<2x128xi32>
    %104 = arith.cmpi slt, %7, %103 : vector<2x128xi32>
    %105 = arith.select %104, %102, %101 : vector<2x128xi1>, vector<2x128xf32>
    %c11 = arith.constant 11 : index
    %106 = memref.load %arg1[%c11] : memref<16xf32, #tpu.memory_space<smem>>
    %107 = vector.broadcast %106 : f32 to vector<2x128xf32>
    %108 = arith.mulf %107, %105 : vector<2x128xf32>
    %109 = arith.addf %100, %108 : vector<2x128xf32>
    %c12_i32 = arith.constant 12 : i32
    %110 = tpu.dynamic_rotate %0 by %c12_i32 dim 1 : vector<2x128xf32>, i32 -> vector<2x128xf32>
    %c12_i32_26 = arith.constant 12 : i32
    %111 = tpu.dynamic_rotate %6 by %c12_i32_26 dim 1 : vector<2x128xf32>, i32 -> vector<2x128xf32>
    %c12_i32_27 = arith.constant 12 : i32
    %112 = vector.broadcast %c12_i32_27 : i32 to vector<2x128xi32>
    %113 = arith.cmpi slt, %7, %112 : vector<2x128xi32>
    %114 = arith.select %113, %111, %110 : vector<2x128xi1>, vector<2x128xf32>
    %c12 = arith.constant 12 : index
    %115 = memref.load %arg1[%c12] : memref<16xf32, #tpu.memory_space<smem>>
    %116 = vector.broadcast %115 : f32 to vector<2x128xf32>
    %117 = arith.mulf %116, %114 : vector<2x128xf32>
    %118 = arith.addf %109, %117 : vector<2x128xf32>
    %c13_i32 = arith.constant 13 : i32
    %119 = tpu.dynamic_rotate %0 by %c13_i32 dim 1 : vector<2x128xf32>, i32 -> vector<2x128xf32>
    %c13_i32_28 = arith.constant 13 : i32
    %120 = tpu.dynamic_rotate %6 by %c13_i32_28 dim 1 : vector<2x128xf32>, i32 -> vector<2x128xf32>
    %c13_i32_29 = arith.constant 13 : i32
    %121 = vector.broadcast %c13_i32_29 : i32 to vector<2x128xi32>
    %122 = arith.cmpi slt, %7, %121 : vector<2x128xi32>
    %123 = arith.select %122, %120, %119 : vector<2x128xi1>, vector<2x128xf32>
    %c13 = arith.constant 13 : index
    %124 = memref.load %arg1[%c13] : memref<16xf32, #tpu.memory_space<smem>>
    %125 = vector.broadcast %124 : f32 to vector<2x128xf32>
    %126 = arith.mulf %125, %123 : vector<2x128xf32>
    %127 = arith.addf %118, %126 : vector<2x128xf32>
    %c14_i32 = arith.constant 14 : i32
    %128 = tpu.dynamic_rotate %0 by %c14_i32 dim 1 : vector<2x128xf32>, i32 -> vector<2x128xf32>
    %c14_i32_30 = arith.constant 14 : i32
    %129 = tpu.dynamic_rotate %6 by %c14_i32_30 dim 1 : vector<2x128xf32>, i32 -> vector<2x128xf32>
    %c14_i32_31 = arith.constant 14 : i32
    %130 = vector.broadcast %c14_i32_31 : i32 to vector<2x128xi32>
    %131 = arith.cmpi slt, %7, %130 : vector<2x128xi32>
    %132 = arith.select %131, %129, %128 : vector<2x128xi1>, vector<2x128xf32>
    %c14 = arith.constant 14 : index
    %133 = memref.load %arg1[%c14] : memref<16xf32, #tpu.memory_space<smem>>
    %134 = vector.broadcast %133 : f32 to vector<2x128xf32>
    %135 = arith.mulf %134, %132 : vector<2x128xf32>
    %136 = arith.addf %127, %135 : vector<2x128xf32>
    %c15_i32 = arith.constant 15 : i32
    %137 = tpu.dynamic_rotate %0 by %c15_i32 dim 1 : vector<2x128xf32>, i32 -> vector<2x128xf32>
    %c15_i32_32 = arith.constant 15 : i32
    %138 = tpu.dynamic_rotate %6 by %c15_i32_32 dim 1 : vector<2x128xf32>, i32 -> vector<2x128xf32>
    %c15_i32_33 = arith.constant 15 : i32
    %139 = vector.broadcast %c15_i32_33 : i32 to vector<2x128xi32>
    %140 = arith.cmpi slt, %7, %139 : vector<2x128xi32>
    %141 = arith.select %140, %138, %137 : vector<2x128xi1>, vector<2x128xf32>
    %c15 = arith.constant 15 : index
    %142 = memref.load %arg1[%c15] : memref<16xf32, #tpu.memory_space<smem>>
    %143 = vector.broadcast %142 : f32 to vector<2x128xf32>
    %144 = arith.mulf %143, %141 : vector<2x128xf32>
    %145 = arith.addf %136, %144 : vector<2x128xf32>
    %c0_34 = arith.constant 0 : index
    %c0_35 = arith.constant 0 : index
    %146 = vector.load %arg4[%c0_34, %c0_35] : memref<2x128xf32, #tpu.memory_space<vmem>>, vector<2x128xf32>
    tpu.vector_store %arg4[%c0_34, %c0_35], %145 {strides = array<i32>} : memref<2x128xf32, #tpu.memory_space<vmem>>, vector<2x128xf32>,
    return
  }
  func.func @transform_0(%arg0: i32) -> i32 {
    %c0_i32 = arith.constant 0 : i32
    %c0_i32_0 = arith.constant 0 : i32
    return %c0_i32 : i32
  }
  func.func @transform_1(%arg0: i32) -> (i32, i32) {
    %c1_i32 = arith.constant 1 : i32
    %0 = arith.subi %arg0, %c1_i32 : i32
    %c0_i32 = arith.constant 0 : i32
    %1 = arith.maxsi %0, %c0_i32 : i32
    %c0_i32_0 = arith.constant 0 : i32
    %c0_i32_1 = arith.constant 0 : i32
    return %c0_i32_0, %1 : i32, i32
  }
  func.func @transform_2(%arg0: i32) -> (i32, i32) {
    %c0_i32 = arith.constant 0 : i32
    %c0_i32_0 = arith.constant 0 : i32
    return %c0_i32, %arg0 : i32, i32
  }
  func.func @transform_3(%arg0: i32) -> (i32, i32) {
    %c0_i32 = arith.constant 0 : i32
    %c0_i32_0 = arith.constant 0 : i32
    return %c0_i32, %arg0 : i32, i32
  }
}

</mosaic_0001>

<llo_original>
// kernel: tpu_custom_call.1
$region0: #{tpu_custom_call.1}
  #allocation0 [shape = 'u32[]', space=smem, size = 0x4, offset = 0x4, fixed_abs, tag = 'smem constant byte address 0x4 - core index']
  #allocation1 [shape = 'u32[144,128]{1,0:T(1,128)}', space=vmem, size = 0x12000, scoped, tag = 'internal scratch']
  %s0 = inlined_call_operand.hbm [shape: f32[16], index: 0, kind: input, shape index: {}]
  %s1 = inlined_call_operand.vmem [shape: f32[2,128], index: 1, kind: input, shape index: {}]
  %s2 = inlined_call_operand.vmem [shape: f32[2,128], index: 2, kind: input, shape index: {}]
  %s3 = inlined_call_operand.hbm [shape: f32[2,128], index: 3, kind: output, shape index: {}]
  %s4 = sld [smem:[#allocation0]]
  $region26: #{tpu_custom_call.1} parent=0
    _
  %s6 = ssub.s32 1, %s4
  %s7 = scalar_select 0, %s6, %s4
  $region1: #{tpu_custom_call.1} parent=0
    #allocation2 [shape = 'u8[512]{0}', space=smem, size = 0x200, scoped, tag = 'input window, operand 0, single buffered']
    #allocation3 [shape = 's32[1]{0}', space=sflag, size = 0x4, scoped, tag = 'scoped memory for tpu_custom_call.1']
    #allocation4 [shape = 's32[1]{0}', space=sflag, size = 0x4, scoped, tag = 'scoped memory for tpu_custom_call.1']
    #allocation5 [shape = 'u8[1024]{0}', space=vmem, size = 0x400, scoped, tag = 'output window, operand 0, single buffered']
    %8 = vsyncpa [#allocation4], 0
    %9 = vsyncpa [#allocation3], 0
    // Predicated region
    $region2: #{tpu_custom_call.1} parent=1 // pred_check
      _
    $region3: #{tpu_custom_call.1} parent=1 // pred_check_branch
      %11 = sbr.rel (0) target = $region5
    $region4: #{tpu_custom_call.1} parent=1 // pred_region
      %s13 = ssub.s32 16, 16
      %14 = vsyncadd [#allocation4], %s13
      %17 = dma.hbm_to_smem %s0, 16, [#allocation2], [#allocation4]
    $region5: #{tpu_custom_call.1} parent=1 // pred_fallthru
      _
    // Predicated region
    $region6: #{tpu_custom_call.1} parent=1 // pred_check
      _
    $region7: #{tpu_custom_call.1} parent=1 // pred_check_branch
      %19 = sbr.rel (0) target = $region9
    $region8: #{tpu_custom_call.1} parent=1 // pred_region
      %s20 = ssub.s32 0, 1
      %p21 = scmp.gt.s32.totalorder %s20, 0
      %s22 = scalar_select %p21, %s20, 0
      %p23 = scmp.lt.s32.totalorder %s22, 0
      %s24 = scalar_select %p23, %s22, 0
      %s25 = smul.addr %s24, 2
      %s26 = scalar_lea.vmem %s1, %s25
      %s27 = ssub.s32 0, 1
      %p28 = scmp.gt.s32.totalorder %s27, 0
      %s29 = scalar_select %p28, %s27, 0
    $region9: #{tpu_custom_call.1} parent=1 // pred_fallthru
      _
    // Predicated region
    $region10: #{tpu_custom_call.1} parent=1 // pred_check
      _
    $region11: #{tpu_custom_call.1} parent=1 // pred_check_branch
      %31 = sbr.rel (0) target = $region13
    $region12: #{tpu_custom_call.1} parent=1 // pred_region
      _
    $region13: #{tpu_custom_call.1} parent=1 // pred_fallthru
      _
    // Predicated region
    $region14: #{tpu_custom_call.1} parent=1 // pred_check
      _
    $region15: #{tpu_custom_call.1} parent=1 // pred_check_branch
      %33 = sbr.rel (0) target = $region17
    $region16: #{tpu_custom_call.1} parent=1 // pred_region
      %34 = dma.done [#allocation4], 16
    $region17: #{tpu_custom_call.1} parent=1 // pred_fallthru
      _
    %35 = sfence
    %s36 = ssub.s32 0, 1
    %p37 = scmp.gt.s32.totalorder %s36, 0
    %s38 = scalar_select %p37, %s36, 0
    %p39 = scmp.lt.s32.totalorder %s38, 0
    %s40 = scalar_select %p39, %s38, 0
    %s41 = smul.addr %s40, 2
    %s42 = scalar_lea.vmem %s1, %s41
    %s43 = ssub.s32 0, 1
    %p44 = scmp.gt.s32.totalorder %s43, 0
    %s45 = scalar_select %p44, %s43, 0
    %p46 = scmp.lt.s32.totalorder %s45, 0
    %s47 = scalar_select %p46, %s45, 0
    %s48 = smul.addr %s47, 2
    %s49 = scalar_lea.vmem %s1, %s48
    %s50 = ssub.s32 0, 1
    %p51 = scmp.gt.s32.totalorder %s50, 0
    %s52 = scalar_select %p51, %s50, 0
    %v53 = vld [vmem:[%s2] sm:$0x3]
    %v54 = vld [vmem:[%s49] sm:$0x3]
    %p55 = scmp.gt.s32.totalorder 0, 0
    %s56 = scalar_select %p55, 1, 0
    %s57 = scvt.s32.f32 %s56
    %v58 = vstv %s57
    %v59 = vmul.f32 %v54, %v58
    %v60 = vlaneseq
    %v61 = vand.u32 %v60, 127
    %s62 = sld [smem:[#allocation2]]
    %v63 = vstv %s62
    %v64 = vmul.f32 %v63, %v53
    %65 = vrot.lane.b32.xlu0 %v53, 1
    %v66 = vpop.permute.xlu0 %65
    %67 = vrot.lane.b32.xlu0 %v59, 1
    %v68 = vpop.permute.xlu0 %67
    %vm69 = vcmp.lt.s32.totalorder %v61, 1
    %v70 = vsel %vm69, %v68, %v66
    %s71 = sld [smem:[#allocation2 + $0x1]]
    %v72 = vstv %s71
    %v73 = vmul.f32 %v72, %v70
    %v74 = vadd.f32 %v64, %v73
    %75 = vrot.lane.b32.xlu0 %v53, 2
    %v76 = vpop.permute.xlu0 %75
    %77 = vrot.lane.b32.xlu0 %v59, 2
    %v78 = vpop.permute.xlu0 %77
    %vm79 = vcmp.lt.s32.totalorder %v61, 2
    %v80 = vsel %vm79, %v78, %v76
    %s81 = sld [smem:[#allocation2 + $0x2]]
    %v82 = vstv %s81
    %v83 = vmul.f32 %v82, %v80
    %v84 = vadd.f32 %v74, %v83
    %85 = vrot.lane.b32.xlu0 %v53, 3
    %v86 = vpop.permute.xlu0 %85
    %87 = vrot.lane.b32.xlu0 %v59, 3
    %v88 = vpop.permute.xlu0 %87
    %vm89 = vcmp.lt.s32.totalorder %v61, 3
    %v90 = vsel %vm89, %v88, %v86
    %s91 = sld [smem:[#allocation2 + $0x3]]
    %v92 = vstv %s91
    %v93 = vmul.f32 %v92, %v90
    %v94 = vadd.f32 %v84, %v93
    %95 = vrot.lane.b32.xlu0 %v53, 4
    %v96 = vpop.permute.xlu0 %95
    %97 = vrot.lane.b32.xlu0 %v59, 4
    %v98 = vpop.permute.xlu0 %97
    %vm99 = vcmp.lt.s32.totalorder %v61, 4
    %v100 = vsel %vm99, %v98, %v96
    %s101 = sld [smem:[#allocation2 + $0x4]]
    %v102 = vstv %s101
    %v103 = vmul.f32 %v102, %v100
    %v104 = vadd.f32 %v94, %v103
    %105 = vrot.lane.b32.xlu0 %v53, 5
    %v106 = vpop.permute.xlu0 %105
    %107 = vrot.lane.b32.xlu0 %v59, 5
    %v108 = vpop.permute.xlu0 %107
    %vm109 = vcmp.lt.s32.totalorder %v61, 5
    %v110 = vsel %vm109, %v108, %v106
    %s111 = sld [smem:[#allocation2 + $0x5]]
    %v112 = vstv %s111
    %v113 = vmul.f32 %v112, %v110
    %v114 = vadd.f32 %v104, %v113
    %115 = vrot.lane.b32.xlu0 %v53, 6
    %v116 = vpop.permute.xlu0 %115
    %117 = vrot.lane.b32.xlu0 %v59, 6
    %v118 = vpop.permute.xlu0 %117
    %vm119 = vcmp.lt.s32.totalorder %v61, 6
    %v120 = vsel %vm119, %v118, %v116
    %s121 = sld [smem:[#allocation2 + $0x6]]
    %v122 = vstv %s121
    %v123 = vmul.f32 %v122, %v120
    %v124 = vadd.f32 %v114, %v123
    %125 = vrot.lane.b32.xlu0 %v53, 7
    %v126 = vpop.permute.xlu0 %125
    %127 = vrot.lane.b32.xlu0 %v59, 7
    %v128 = vpop.permute.xlu0 %127
    %vm129 = vcmp.lt.s32.totalorder %v61, 7
    %v130 = vsel %vm129, %v128, %v126
    %s131 = sld [smem:[#allocation2 + $0x7]]
    %v132 = vstv %s131
    %v133 = vmul.f32 %v132, %v130
    %v134 = vadd.f32 %v124, %v133
    %135 = vrot.lane.b32.xlu0 %v53, 8
    %v136 = vpop.permute.xlu0 %135
    %137 = vrot.lane.b32.xlu0 %v59, 8
    %v138 = vpop.permute.xlu0 %137
    %vm139 = vcmp.lt.s32.totalorder %v61, 8
    %v140 = vsel %vm139, %v138, %v136
    %s141 = sld [smem:[#allocation2 + $0x8]]
    %v142 = vstv %s141
    %v143 = vmul.f32 %v142, %v140
    %v144 = vadd.f32 %v134, %v143
    %145 = vrot.lane.b32.xlu0 %v53, 9
    %v146 = vpop.permute.xlu0 %145
    %147 = vrot.lane.b32.xlu0 %v59, 9
    %v148 = vpop.permute.xlu0 %147
    %vm149 = vcmp.lt.s32.totalorder %v61, 9
    %v150 = vsel %vm149, %v148, %v146
    %s151 = sld [smem:[#allocation2 + $0x9]]
    %v152 = vstv %s151
    %v153 = vmul.f32 %v152, %v150
    %v154 = vadd.f32 %v144, %v153
    %155 = vrot.lane.b32.xlu0 %v53, 10
    %v156 = vpop.permute.xlu0 %155
    %157 = vrot.lane.b32.xlu0 %v59, 10
    %v158 = vpop.permute.xlu0 %157
    %vm159 = vcmp.lt.s32.totalorder %v61, 10
    %v160 = vsel %vm159, %v158, %v156
    %s161 = sld [smem:[#allocation2 + $0xa]]
    %v162 = vstv %s161
    %v163 = vmul.f32 %v162, %v160
    %v164 = vadd.f32 %v154, %v163
    %165 = vrot.lane.b32.xlu0 %v53, 11
    %v166 = vpop.permute.xlu0 %165
    %167 = vrot.lane.b32.xlu0 %v59, 11
    %v168 = vpop.permute.xlu0 %167
    %vm169 = vcmp.lt.s32.totalorder %v61, 11
    %v170 = vsel %vm169, %v168, %v166
    %s171 = sld [smem:[#allocation2 + $0xb]]
    %v172 = vstv %s171
    %v173 = vmul.f32 %v172, %v170
    %v174 = vadd.f32 %v164, %v173
    %175 = vrot.lane.b32.xlu0 %v53, 12
    %v176 = vpop.permute.xlu0 %175
    %177 = vrot.lane.b32.xlu0 %v59, 12
    %v178 = vpop.permute.xlu0 %177
    %vm179 = vcmp.lt.s32.totalorder %v61, 12
    %v180 = vsel %vm179, %v178, %v176
    %s181 = sld [smem:[#allocation2 + $0xc]]
    %v182 = vstv %s181
    %v183 = vmul.f32 %v182, %v180
    %v184 = vadd.f32 %v174, %v183
    %185 = vrot.lane.b32.xlu0 %v53, 13
    %v186 = vpop.permute.xlu0 %185
    %187 = vrot.lane.b32.xlu0 %v59, 13
    %v188 = vpop.permute.xlu0 %187
    %vm189 = vcmp.lt.s32.totalorder %v61, 13
    %v190 = vsel %vm189, %v188, %v186
    %s191 = sld [smem:[#allocation2 + $0xd]]
    %v192 = vstv %s191
    %v193 = vmul.f32 %v192, %v190
    %v194 = vadd.f32 %v184, %v193
    %195 = vrot.lane.b32.xlu0 %v53, 14
    %v196 = vpop.permute.xlu0 %195
    %197 = vrot.lane.b32.xlu0 %v59, 14
    %v198 = vpop.permute.xlu0 %197
    %vm199 = vcmp.lt.s32.totalorder %v61, 14
    %v200 = vsel %vm199, %v198, %v196
    %s201 = sld [smem:[#allocation2 + $0xe]]
    %v202 = vstv %s201
    %v203 = vmul.f32 %v202, %v200
    %v204 = vadd.f32 %v194, %v203
    %205 = vrot.lane.b32.xlu0 %v53, 15
    %v206 = vpop.permute.xlu0 %205
    %207 = vrot.lane.b32.xlu0 %v59, 15
    %v208 = vpop.permute.xlu0 %207
    %vm209 = vcmp.lt.s32.totalorder %v61, 15
    %v210 = vsel %vm209, %v208, %v206
    %s211 = sld [smem:[#allocation2 + $0xf]]
    %v212 = vstv %s211
    %v213 = vmul.f32 %v212, %v210
    %v214 = vadd.f32 %v204, %v213
    %215 = vst [vmem:[#allocation5] sm:$0x3] %v214
    // Predicated region
    $region18: #{tpu_custom_call.1} parent=1 // pred_check
      _
    $region19: #{tpu_custom_call.1} parent=1 // pred_check_branch
      %217 = sbr.rel (0) target = $region21
    $region20: #{tpu_custom_call.1} parent=1 // pred_region
      %s219 = ssub.s32 32, 32
      %220 = vsyncadd [#allocation3], %s219
      %s222 = sshll.u32 [#allocation5], 4
      %s223 = int_to_ptr.vmem [resolvable:$true] %s222
      %225 = dma.vmem_to_hbm [thread:$0]  %s223, 32, %s3, [#allocation3]
    $region21: #{tpu_custom_call.1} parent=1 // pred_fallthru
      _
    // Predicated region
    $region22: #{tpu_custom_call.1} parent=1 // pred_check
      _
    $region23: #{tpu_custom_call.1} parent=1 // pred_check_branch
      %227 = sbr.rel (0) target = $region25
    $region24: #{tpu_custom_call.1} parent=1 // pred_region
      %228 = dma.done [#allocation3], 32
    $region25: #{tpu_custom_call.1} parent=1 // pred_fallthru
      _
    %229 = vsyncpa [#allocation3], 1
    %230 = vsyncpa [#allocation4], 1

</llo_original>
